<compile_context>
chip_gen: v6e
topology: v6e:2x2x1
jax: 0.10.0
libtpu: 0.0.40
codegen_flags: <defaults>
</compile_context>

<pallas_src>
import math
import functools

import numpy as np
import jax
import jax.numpy as jnp
from jax.experimental import pallas as pl
from jax.experimental.pallas import tpu as pltpu


# ----------------------------------------------------------------------------
# Pallas kernel
# ----------------------------------------------------------------------------
def _adafno_kernel(x_ref, w1_ref, b1_ref, w2_ref, b2_ref, o_ref, *, lam):
    """One row-tile of the compacted spectral complex MLP.

    x_ref : (tn, k*2C)    bf16, lanes = [xr_0 | xi_0 | xr_1 | xi_1 | ...]
    w1_ref: (k*2C, k*2Cf) bf16, block-diag k-replicated [[W1r, W1i], [-W1i, W1r]]
    b1_ref: (1, k*2Cf)    f32,  k-tiled [b1r-b1i | b1r+b1i]
    w2_ref: (k*2Cf, k*2C) bf16, block-diag k-replicated [[W2r, W2i], [-W2i, W2r]]
    b2_ref: (1, k*2C)     f32,  k-tiled [b2r-b2i | b2r+b2i]
    o_ref : (tn, k*2C)    f32,  softshrunk [o2r_0 | o2i_0 | ...]
    """
    # layer 1 (complex linear as one real dot; AdaFNO2D has no activation)
    o1 = jnp.dot(x_ref[...], w1_ref[...],
                 preferred_element_type=jnp.float32) + b1_ref[...]
    # layer 2 (complex linear)
    o2 = jnp.dot(o1.astype(jnp.bfloat16), w2_ref[...],
                 preferred_element_type=jnp.float32) + b2_ref[...]
    # softshrink: sign(v) * max(|v| - lam, 0)
    mag = jnp.maximum(jnp.abs(o2) - lam, 0.0)
    o_ref[...] = jnp.where(o2 >= 0.0, mag, -mag)


# ----------------------------------------------------------------------------
# Pallas wrapper
# ----------------------------------------------------------------------------
_TILE_CAP = 512                      # 512-row tiles already ~85% of roofline
_VMEM_BUDGET = 32 * 1024 * 1024      # working-set target (fits v7x 64 MiB VMEM)
_VMEM_LIMIT = 48 * 1024 * 1024


def _round_up(a, b):
    return -(-a // b) * b


def _lane_target():
    """Target lane width for the packed matmul: 128 on v5e, 256 elsewhere."""
    try:
        kind = jax.devices()[0].device_kind.lower()
    except Exception:
        return 256
    if "v5e" in kind or "v5 lite" in kind or "v5lite" in kind:
        return 128
    return 256


def _pick_tile(m_packed, lane_in, lane_mid):
    """Largest row tile (multiple of 8, <= _TILE_CAP) under an honest,
    lane-padded VMEM estimate; also guarantees >= 2 tiles when there is work
    for both v7x TensorCores."""
    li = _round_up(lane_in, 128)
    lm = _round_up(lane_mid, 128)
    weight_bytes = 2 * li * lm * 2 + 4 * (li + lm)       # 2x bf16 W + f32 biases
    per_row = (2 * 2 * li        # bf16 input, double-buffered
               + 2 * 4 * li      # f32 output, double-buffered
               + 6 * lm          # f32 o1 + bf16 copy
               + 4 * li)         # f32 o2
    avail = max(_VMEM_BUDGET - weight_bytes, 1 << 20)
    tn = int(min(_TILE_CAP, avail // per_row))
    tn = max(8, (tn // 8) * 8)
    if m_packed > 8:                                      # >= 2 tiles (megacore)
        tn = min(tn, max(8, _round_up(-(-m_packed // 2), 8)))
    if m_packed <= tn:
        tn = max(8, _round_up(m_packed, 8))
    return tn


def adafno_spectral_mlp(x_cr, w1, b1, w2, b2, lam):
    """x_cr: (M, 2C) rows [xr | xi] (unmasked spectral rows only, f32);
    w1: (2C, 2Cf), w2: (2Cf, 2C) complex-as-real dense weights (f32);
    b1: (2Cf,), b2: (2C,) pre-combined biases (f32).
    Returns (M, 2C) f32 softshrunk [o2r | o2i]."""
    m, d = x_cr.shape
    dm = w1.shape[1]
    k = max(1, _lane_target() // d)          # lane-pack factor (rows per vreg row)
    lane_in, lane_mid = k * d, k * dm

    m_packed = -(-m // k)
    tn = _pick_tile(m_packed, lane_in, lane_mid)
    grid_n = -(-m_packed // tn)
    m_pad = grid_n * tn * k

    if m_pad != m:
        x_cr = jnp.pad(x_cr, ((0, m_pad - m), (0, 0)))
    xp = x_cr.reshape(grid_n * tn, lane_in).astype(jnp.bfloat16)

    # k-fold block-diagonal replication of the complex-as-real weights
    eye = jnp.eye(k, dtype=jnp.float32)
    w1b = jnp.kron(eye, w1).astype(jnp.bfloat16)          # (lane_in, lane_mid)
    w2b = jnp.kron(eye, w2).astype(jnp.bfloat16)          # (lane_mid, lane_in)
    b1b = jnp.tile(b1.astype(jnp.float32), k).reshape(1, lane_mid)
    b2b = jnp.tile(b2.astype(jnp.float32), k).reshape(1, lane_in)

    out = pl.pallas_call(
        functools.partial(_adafno_kernel, lam=float(lam)),
        out_shape=jax.ShapeDtypeStruct((grid_n * tn, lane_in), jnp.float32),
        grid=(grid_n,),
        in_specs=[
            pl.BlockSpec((tn, lane_in), lambda i: (i, 0)),
            pl.BlockSpec((lane_in, lane_mid), lambda i: (0, 0)),
            pl.BlockSpec((1, lane_mid), lambda i: (0, 0)),
            pl.BlockSpec((lane_mid, lane_in), lambda i: (0, 0)),
            pl.BlockSpec((1, lane_in), lambda i: (0, 0)),
        ],
        out_specs=pl.BlockSpec((tn, lane_in), lambda i: (i, 0)),
        compiler_params=pltpu.CompilerParams(
            dimension_semantics=("parallel",),
            vmem_limit_bytes=_VMEM_LIMIT,
        ),
    )(xp, w1b, b1b, w2b, b2b)

    out = out.reshape(m_pad, d)
    return out[:m] if m_pad != m else out


# ----------------------------------------------------------------------------
# Static (shape-dependent) constants, built with numpy at trace time
# ----------------------------------------------------------------------------
def _build_sinusoidal_freq_embedding(H, W_half, d_embed, base=10000.0):
    k_x = np.arange(H, dtype=np.float32)[:, None]
    k_y = np.arange(W_half, dtype=np.float32)[:, None]
    d_half = d_embed // 2
    div = np.exp(np.arange(0, d_half, 2, dtype=np.float32)
                 * (-math.log(base) / d_half)).astype(np.float32)
    fx = np.zeros((H, d_half), np.float32)
    fy = np.zeros((W_half, d_half), np.float32)
    fx[:, 0::2] = np.sin(k_x * div[None, :])
    fx[:, 1::2] = np.cos(k_x * div[None, :])
    fy[:, 0::2] = np.sin(k_y * div[None, :])
    fy[:, 1::2] = np.cos(k_y * div[None, :])
    fx2 = np.broadcast_to(fx[:, None, :], (H, W_half, d_half))
    fy2 = np.broadcast_to(fy[None, :, :], (H, W_half, d_half))
    return np.concatenate([fx2, fy2], axis=-1)           # (H, W_half, d_embed)


def _build_wavelength_mask(H, W_half, crop_x, crop_y, domain_size):
    mask = np.zeros((H, W_half), dtype=bool)
    for kx in range(H):
        fx = kx if kx <= H // 2 else H - kx
        lx = math.inf if fx == 0 else domain_size / fx
        if not (crop_x[0] <= lx <= crop_x[1]):
            continue
        for ky in range(W_half):
            ly = math.inf if ky == 0 else domain_size / ky
            if crop_y[0] <= ly <= crop_y[1]:
                mask[kx, ky] = True
    return mask


def _block_diag(w):
    """(nb, din, dout) per-block weights -> dense (nb*din, nb*dout) block-diag."""
    nb, din, dout = w.shape
    eye = jnp.eye(nb, dtype=w.dtype)
    return (eye[:, None, :, None] * w[:, :, None, :]).reshape(nb * din, nb * dout)


# ----------------------------------------------------------------------------
# Parameter init (same shapes as the PyTorch module; deterministic)
# ----------------------------------------------------------------------------
def init_adafno2d_params(key, hidden_size, num_blocks, hidden_size_factor=1,
                         scale=0.02):
    bs = hidden_size // num_blocks
    bsf = bs * hidden_size_factor
    k1, k2, k3, k4, k5 = jax.random.split(key, 5)
    return dict(
        # [0] = "first_r/second_r" Linear, [1] = "first_i/second_i" Linear.
        # Weights stored (in, out) (i.e. nn.Linear weight transposed).
        w1=scale * jax.random.normal(k1, (2, num_blocks, bs, bsf), jnp.float32),
        b1=scale * jax.random.normal(k2, (2, num_blocks, bsf), jnp.float32),
        w2=scale * jax.random.normal(k3, (2, num_blocks, bsf, bs), jnp.float32),
        b2=scale * jax.random.normal(k4, (2, num_blocks, bs), jnp.float32),
        alpha=scale * jax.random.normal(k5, (hidden_size,), jnp.float32),
    )


# ----------------------------------------------------------------------------
# Full AdaFNO2D forward
# ----------------------------------------------------------------------------
def adafno2d_forward(params, x, *, num_blocks=8, sparsity_threshold=0.01,
                     hidden_size_factor=1, res_mult=1, channel_first=True,
                     domain_size=64, wavelength_crop_x=(8, 64),
                     wavelength_crop_y=(8, 64), base=10000.0, use_pallas=True):
    if channel_first:
        x = jnp.transpose(x, (0, 2, 3, 1))                # -> (B, H, W, C)
    x = x.astype(jnp.float32)
    B, H, W, C = x.shape
    nb = num_blocks
    bs = C // nb
    lam = sparsity_threshold

    # TODO(synk): rfftn/irfftn have no Pallas TPU primitive; they stay in XLA.
    xf = jnp.fft.rfftn(x, axes=(1, 2), norm='ortho')      # (B, H, Wf, C) complex
    Wf = xf.shape[2]

    freq_emb = _build_sinusoidal_freq_embedding(H, Wf, C, base)      # numpy
    ds = domain_size if H == domain_size else H           # matches torch module
    mask_np = _build_wavelength_mask(H, Wf, wavelength_crop_x,
                                     wavelength_crop_y, ds)
    idx = np.nonzero(mask_np.reshape(-1))[0]              # static unmasked rows

    if use_pallas:
        if idx.size == 0:
            o2r = jnp.zeros((B, H, Wf, C), jnp.float32)
            o2i = jnp.zeros((B, H, Wf, C), jnp.float32)
        else:
            ns = int(idx.size)
            # gather only the unmasked spectral rows (mask/idx are static)
            xr_full = jnp.real(xf).reshape(B, H * Wf, C)
            xi_full = jnp.imag(xf).reshape(B, H * Wf, C)
            fe_sel = jnp.asarray(freq_emb.reshape(H * Wf, C)[idx])   # (ns, C)
            # torch adds alpha*freq_emb to the complex x_fft == real part only
            xr_sel = xr_full[:, idx] + params['alpha'] * fe_sel
            xi_sel = xi_full[:, idx]
            x_cr = jnp.concatenate([xr_sel, xi_sel],
                                   axis=-1).reshape(B * ns, 2 * C)   # [xr | xi]

            # block-diagonal dense weights + complex-as-real combination
            # TODO(synk): for block_size >= ~128 switch to a per-block batched
            # formulation instead of dense block-diag (num_blocks-fold FLOP
            # redundancy); with block_size=4 dense is the right trade.
            w1r = _block_diag(params['w1'][0]); w1i = _block_diag(params['w1'][1])
            w2r = _block_diag(params['w2'][0]); w2i = _block_diag(params['w2'][1])
            w1 = jnp.concatenate([jnp.concatenate([w1r, w1i], axis=1),
                                  jnp.concatenate([-w1i, w1r], axis=1)], axis=0)
            w2 = jnp.concatenate([jnp.concatenate([w2r, w2i], axis=1),
                                  jnp.concatenate([-w2i, w2r], axis=1)], axis=0)
            b1r = params['b1'][0].reshape(-1); b1i = params['b1'][1].reshape(-1)
            b2r = params['b2'][0].reshape(-1); b2i = params['b2'][1].reshape(-1)
            # nn.Linear biases: real path gets (br - bi), imag path gets (br + bi)
            b1 = jnp.concatenate([b1r - b1i, b1r + b1i])
            b2 = jnp.concatenate([b2r - b2i, b2r + b2i])

            o_cr = adafno_spectral_mlp(x_cr, w1, b1, w2, b2, lam)    # (B*ns, 2C)
            o_cr = o_cr.reshape(B, ns, 2 * C)
            zeros = jnp.zeros((B, H * Wf, C), jnp.float32)
            o2r = zeros.at[:, idx].set(o_cr[..., :C]).reshape(B, H, Wf, C)
            o2i = zeros.at[:, idx].set(o_cr[..., C:]).reshape(B, H, Wf, C)
    else:
        # pure-JAX reference mirroring the PyTorch per-block gather/scatter path
        xr = jnp.real(xf) + params['alpha'] * jnp.asarray(freq_emb)[None]
        xi = jnp.imag(xf)
        xr_f = xr.reshape(B, H * Wf, nb, bs)
        xi_f = xi.reshape(B, H * Wf, nb, bs)
        o2r = jnp.zeros((B, H * Wf, nb, bs), jnp.float32)
        o2i = jnp.zeros((B, H * Wf, nb, bs), jnp.float32)
        if idx.size > 0:
            xrm = xr_f[:, idx]
            xim = xi_f[:, idx]
            w1r_, w1i_ = params['w1'][0], params['w1'][1]
            b1r_, b1i_ = params['b1'][0], params['b1'][1]
            w2r_, w2i_ = params['w2'][0], params['w2'][1]
            b2r_, b2i_ = params['b2'][0], params['b2'][1]
            o1r = ((jnp.einsum('bmni,nio->bmno', xrm, w1r_) + b1r_)
                   - (jnp.einsum('bmni,nio->bmno', xim, w1i_) + b1i_))
            o1i = ((jnp.einsum('bmni,nio->bmno', xim, w1r_) + b1r_)
                   + (jnp.einsum('bmni,nio->bmno', xrm, w1i_) + b1i_))
            o2r_m = ((jnp.einsum('bmno,noc->bmnc', o1r, w2r_) + b2r_)
                     - (jnp.einsum('bmno,noc->bmnc', o1i, w2i_) + b2i_))
            o2i_m = ((jnp.einsum('bmno,noc->bmnc', o1i, w2r_) + b2r_)
                     + (jnp.einsum('bmno,noc->bmnc', o1r, w2i_) + b2i_))
            o2r = o2r.at[:, idx].set(o2r_m)
            o2i = o2i.at[:, idx].set(o2i_m)
        shrink = lambda v: jnp.sign(v) * jnp.maximum(jnp.abs(v) - lam, 0.0)
        o2r = shrink(o2r).reshape(B, H, Wf, C)
        o2i = shrink(o2i).reshape(B, H, Wf, C)

    xc = jax.lax.complex(o2r, o2i)
    out = jnp.fft.irfftn(xc, s=(H * res_mult, W * res_mult), axes=(1, 2),
                         norm='ortho')
    if channel_first:
        out = jnp.transpose(out, (0, 3, 1, 2))
    return out


# ----------------------------------------------------------------------------
if __name__ == "__main__":
    B, C, H, W = 2, 32, 16, 16          # hidden_size = 32, block_size = 4
    num_blocks = 8
    key = jax.random.PRNGKey(0)
    kx, kp = jax.random.split(key)
    x = jax.random.normal(kx, (B, C, H, W), jnp.float32)
    params = init_adafno2d_params(kp, hidden_size=C, num_blocks=num_blocks)

    fwd = jax.jit(lambda p, v: adafno2d_forward(p, v, num_blocks=num_blocks))
    out = jax.block_until_ready(fwd(params, x))

    # independent pure-JAX f32 reference (per-block masked gather/scatter,
    # 4-mult complex form) of the same forward math
    ref = jax.block_until_ready(
        adafno2d_forward(params, x, num_blocks=num_blocks, use_pallas=False))

    assert out.shape == (B, C, H, W)
    assert out.dtype == jnp.float32
    max_err = float(jnp.max(jnp.abs(out - ref)))
    assert max_err < 2e-3, f"max abs err {max_err}"

    print("KERNEL_OK")
</pallas_src>

<mosaic_0001>
module attributes {stable_mosaic.version = 11 : i64} {
  func.func @_adafno_kernel(%arg0: i32, %arg1: memref<8x256xbf16, #tpu.memory_space<vmem>>, %arg2: memref<256x256xbf16, #tpu.memory_space<vmem>>, %arg3: memref<1x256xf32, #tpu.memory_space<vmem>>, %arg4: memref<256x256xbf16, #tpu.memory_space<vmem>>, %arg5: memref<1x256xf32, #tpu.memory_space<vmem>>, %arg6: memref<8x256xf32, #tpu.memory_space<vmem>>) attributes {dimension_semantics = [#tpu.dimension_semantics<parallel>], iteration_bounds = array<i64: 1>, scalar_prefetch = 0 : i64, scratch_operands = 0 : i64, tpu.core_type = #tpu.core_type<tc>, window_params = [{transform_indices = @transform_0, window_bounds = array<i64: 8, 256>}, {pipeline_mode = #tpu.pipeline_mode<synchronous>, transform_indices = @transform_1, window_bounds = array<i64: 256, 256>}, {pipeline_mode = #tpu.pipeline_mode<synchronous>, transform_indices = @transform_2, window_bounds = array<i64: 1, 256>}, {pipeline_mode = #tpu.pipeline_mode<synchronous>, transform_indices = @transform_3, window_bounds = array<i64: 256, 256>}, {pipeline_mode = #tpu.pipeline_mode<synchronous>, transform_indices = @transform_4, window_bounds = array<i64: 1, 256>}, {transform_indices = @transform_5, window_bounds = array<i64: 8, 256>}]} {
    %c0 = arith.constant 0 : index
    %c0_0 = arith.constant 0 : index
    %0 = vector.load %arg1[%c0, %c0_0] : memref<8x256xbf16, #tpu.memory_space<vmem>>, vector<8x256xbf16>
    %c0_1 = arith.constant 0 : index
    %c0_2 = arith.constant 0 : index
    %1 = vector.load %arg2[%c0_1, %c0_2] : memref<256x256xbf16, #tpu.memory_space<vmem>>, vector<256x256xbf16>
    %cst = arith.constant dense<0.000000e+00> : vector<8x256xf32>
    %2 = tpu.matmul %0, %1, %cst {dimension_numbers = #tpu.dot_dimension_numbers<[1], [0], [0], [1], [0, 0, 1, 1], [], []>} : vector<8x256xbf16>, vector<256x256xbf16>, vector<8x256xf32> -> vector<8x256xf32>
    %c0_3 = arith.constant 0 : index
    %c0_4 = arith.constant 0 : index
    %3 = vector.load %arg3[%c0_3, %c0_4] : memref<1x256xf32, #tpu.memory_space<vmem>>, vector<1x256xf32>
    %4 = vector.broadcast %3 : vector<1x256xf32> to vector<8x256xf32>
    %5 = arith.addf %2, %4 : vector<8x256xf32>
    %6 = arith.truncf %5 : vector<8x256xf32> to vector<8x256xbf16>
    %c0_5 = arith.constant 0 : index
    %c0_6 = arith.constant 0 : index
    %7 = vector.load %arg4[%c0_5, %c0_6] : memref<256x256xbf16, #tpu.memory_space<vmem>>, vector<256x256xbf16>
    %cst_7 = arith.constant dense<0.000000e+00> : vector<8x256xf32>
    %8 = tpu.matmul %6, %7, %cst_7 {dimension_numbers = #tpu.dot_dimension_numbers<[1], [0], [0], [1], [0, 0, 1, 1], [], []>} : vector<8x256xbf16>, vector<256x256xbf16>, vector<8x256xf32> -> vector<8x256xf32>
    %c0_8 = arith.constant 0 : index
    %c0_9 = arith.constant 0 : index
    %9 = vector.load %arg5[%c0_8, %c0_9] : memref<1x256xf32, #tpu.memory_space<vmem>>, vector<1x256xf32>
    %10 = vector.broadcast %9 : vector<1x256xf32> to vector<8x256xf32>
    %11 = arith.addf %8, %10 : vector<8x256xf32>
    %12 = math.absf %11 : vector<8x256xf32>
    %cst_10 = arith.constant 0.00999999977 : f32
    %13 = vector.broadcast %cst_10 : f32 to vector<8x256xf32>
    %14 = arith.subf %12, %13 : vector<8x256xf32>
    %cst_11 = arith.constant 0.000000e+00 : f32
    %15 = vector.broadcast %cst_11 : f32 to vector<8x256xf32>
    %16 = arith.maximumf %14, %15 : vector<8x256xf32>
    %cst_12 = arith.constant 0.000000e+00 : f32
    %17 = vector.broadcast %cst_12 : f32 to vector<8x256xf32>
    %18 = arith.cmpf oge, %11, %17 : vector<8x256xf32>
    %cst_13 = arith.constant 0.000000e+00 : f32
    %19 = vector.broadcast %cst_13 : f32 to vector<8x256xf32>
    %20 = arith.subf %19, %16 : vector<8x256xf32>
    %21 = arith.select %18, %16, %20 : vector<8x256xi1>, vector<8x256xf32>
    %c0_14 = arith.constant 0 : index
    %c0_15 = arith.constant 0 : index
    %22 = vector.load %arg6[%c0_14, %c0_15] : memref<8x256xf32, #tpu.memory_space<vmem>>, vector<8x256xf32>
    tpu.vector_store %arg6[%c0_14, %c0_15], %21 {strides = array<i32>} : memref<8x256xf32, #tpu.memory_space<vmem>>, vector<8x256xf32>,
    return
  }
  func.func @transform_0(%arg0: i32) -> (i32, i32) {
    %c0_i32 = arith.constant 0 : i32
    %c0_i32_0 = arith.constant 0 : i32
    return %arg0, %c0_i32 : i32, i32
  }
  func.func @transform_1(%arg0: i32) -> (i32, i32) {
    %c0_i32 = arith.constant 0 : i32
    %c0_i32_0 = arith.constant 0 : i32
    %c0_i32_1 = arith.constant 0 : i32
    return %c0_i32, %c0_i32_0 : i32, i32
  }
  func.func @transform_2(%arg0: i32) -> (i32, i32) {
    %c0_i32 = arith.constant 0 : i32
    %c0_i32_0 = arith.constant 0 : i32
    %c0_i32_1 = arith.constant 0 : i32
    return %c0_i32, %c0_i32_0 : i32, i32
  }
  func.func @transform_3(%arg0: i32) -> (i32, i32) {
    %c0_i32 = arith.constant 0 : i32
    %c0_i32_0 = arith.constant 0 : i32
    %c0_i32_1 = arith.constant 0 : i32
    return %c0_i32, %c0_i32_0 : i32, i32
  }
  func.func @transform_4(%arg0: i32) -> (i32, i32) {
    %c0_i32 = arith.constant 0 : i32
    %c0_i32_0 = arith.constant 0 : i32
    %c0_i32_1 = arith.constant 0 : i32
    return %c0_i32, %c0_i32_0 : i32, i32
  }
  func.func @transform_5(%arg0: i32) -> (i32, i32) {
    %c0_i32 = arith.constant 0 : i32
    %c0_i32_0 = arith.constant 0 : i32
    return %arg0, %c0_i32 : i32, i32
  }
}

</mosaic_0001>

<llo_original>
// kernel: neg.2
$region0: #{neg.2}
  #allocation0 [shape = 's32[1]{0}', space=sflag, size = 0x4, scoped, tag = 'scoped memory for neg.2']
  %s0 = inlined_call_operand.vmem [shape: f32[32,32], index: 0, kind: input, shape index: {}]
  %s1 = inlined_call_operand.vmem [shape: f32[32,32], index: 1, kind: output, shape index: {}]
  %v2 = vld [vmem:[%s0] sm:$0xff]
  %3 = xla_tuple %v2
  %4 = xla_tuple %3
  %v5 = vxor.u32 %v2, 2147483648
  %6 = xla_tuple %v5
  %7 = vst [vmem:[%s1] sm:$0xff] %v5
  %s8 = scalar_lea.vmem %s0, 8
  %v9 = vld [vmem:[%s8] sm:$0xff]
  %10 = xla_tuple %v9
  %11 = xla_tuple %10
  %v12 = vxor.u32 %v9, 2147483648
  %13 = xla_tuple %v12
  %s14 = scalar_lea.vmem %s1, 8
  %15 = vst [vmem:[%s14] sm:$0xff] %v12
  %s16 = scalar_lea.vmem %s0, 16
  %v17 = vld [vmem:[%s16] sm:$0xff]
  %18 = xla_tuple %v17
  %19 = xla_tuple %18
  %v20 = vxor.u32 %v17, 2147483648
  %21 = xla_tuple %v20
  %s22 = scalar_lea.vmem %s1, 16
  %23 = vst [vmem:[%s22] sm:$0xff] %v20
  %s24 = scalar_lea.vmem %s0, 24
  %v25 = vld [vmem:[%s24] sm:$0xff]
  %26 = xla_tuple %v25
  %27 = xla_tuple %26
  %v28 = vxor.u32 %v25, 2147483648
  %29 = xla_tuple %v28
  %s30 = scalar_lea.vmem %s1, 24
  %31 = vst [vmem:[%s30] sm:$0xff] %v28

// kernel: tile.13
$region0: #{tile.13}
  #allocation0 [shape = 's32[1]{0}', space=sflag, size = 0x4, scoped, tag = 'scoped memory for tile.13']
  %s0 = inlined_call_operand.vmem [shape: f32[64], index: 0, kind: input, shape index: {}]
  %s1 = inlined_call_operand.vmem [shape: f32[4,64], index: 1, kind: output, shape index: {}]
  // Predicated region
  $region2: #{tile.13} parent=0 // pred_check
    _
  $region3: #{tile.13} parent=0 // pred_check_branch
    %3 = sbr.rel (0) target = $region5
  $region4: #{tile.13} parent=0 // pred_region
    _
  $region5: #{tile.13} parent=0 // pred_fallthru
    _
  %v4 = vld [vmem:[%s0] ss:$0 sm:$0xff]
  %5 = vst [vmem:[%s1] sm:$0xf] %v4

// kernel: tile.14
$region0: #{tile.14}
  %s0 = inlined_call_operand.vmem [shape: f32[4,64], index: 0, kind: input, shape index: {}]
  %s1 = inlined_call_operand.vmem [shape: f32[1,256], index: 1, kind: output, shape index: {}]
  $region1: #{tile.14} parent=0
    #allocation0 [shape = 'u8[8192]{0}', space=vmem, size = 0x2000, scoped, tag = 'scoped mem for output reshape']
    #allocation1 [shape = 'u8[4096]{0}', space=vmem, size = 0x1000, scoped, tag = 'scoped mem for input reshape']
    %s3 = sshll.u32 1, 4
    %s4 = ssub.s32 %s3, 1
    %v5 = vld [vmem:[%s0] sm:%s4]
    %6 = vst [vmem:[#allocation1] sm:%s4] %v5
    %s7 = smov 3
    %v8 = vld [vmem:[#allocation1] ss:$2 sm:%s7]
    %vm9 = vcmask 523264
    %10 = vst.msk [vmem:[#allocation0] ss:$8 sm:$0x3] %vm9, %v8
    %s11 = scalar_lea.vmem [#allocation1], 1
    %s12 = smov 3
    %v13 = vld [vmem:[%s11] ss:$2 sm:%s12]
    %14 = vrot.lane.b32.xlu0 %v13, 64
    %v15 = vpop.permute.xlu0 %14
    %vm16 = vcmask 1048064
    %17 = vst.msk [vmem:[#allocation0] ss:$8 sm:$0x3] %vm16, %v15
    %s19 = sshll.u32 1, 1
    %s20 = ssub.s32 %s19, 1
    %v22 = vld [vmem:[#allocation0] sm:%s20]
    %s23 = sshll.u32 1, 1
    %s24 = ssub.s32 %s23, 1
    %25 = vst [vmem:[%s1] sm:%s24] %v22
    %s26 = scalar_lea.vmem [#allocation0], 8
    %v27 = vld [vmem:[%s26] sm:%s20]
    %s28 = sshll.u32 1, 1
    %s29 = ssub.s32 %s28, 1
    %s30 = scalar_lea.vmem %s1, 1
    %31 = vst [vmem:[%s30] sm:%s29] %v27

// kernel: _lambda_.1
$region0: #{_lambda_.1}
  #allocation0 [shape = 'u32[]', space=smem, size = 0x4, offset = 0x4, fixed_abs, tag = 'smem constant byte address 0x4 - core index']
  #allocation1 [shape = 'u32[144,128]{1,0:T(1,128)}', space=vmem, size = 0x12000, scoped, tag = 'internal scratch']
  %s0 = inlined_call_operand.vmem [shape: bf16[8,256], index: 0, kind: input, shape index: {}]
  %s1 = inlined_call_operand.vmem [shape: bf16[256,256], index: 1, kind: input, shape index: {}]
  %s2 = inlined_call_operand.vmem [shape: f32[1,256], index: 2, kind: input, shape index: {}]
  %s3 = inlined_call_operand.vmem [shape: bf16[256,256], index: 3, kind: input, shape index: {}]
  %s4 = inlined_call_operand.vmem [shape: f32[1,256], index: 4, kind: input, shape index: {}]
  %s5 = inlined_call_operand.vmem [shape: f32[8,256], index: 5, kind: output, shape index: {}]
  %s6 = sld [smem:[#allocation0]]
  $region30: #{_lambda_.1} parent=0
    _
  %s8 = ssub.s32 1, %s6
  %s9 = scalar_select 0, %s8, %s6
  // Predicated region
  $region2: #{_lambda_.1} parent=0 // pred_check
    _
  $region3: #{_lambda_.1} parent=0 // pred_check_branch
    %11 = sbr.rel (0) target = $region5
  $region4: #{_lambda_.1} parent=0 // pred_region
    _
  $region5: #{_lambda_.1} parent=0 // pred_fallthru
    _
  // Predicated region
  $region6: #{_lambda_.1} parent=0 // pred_check
    _
  $region7: #{_lambda_.1} parent=0 // pred_check_branch
    %13 = sbr.rel (0) target = $region9
  $region8: #{_lambda_.1} parent=0 // pred_region
    _
  $region9: #{_lambda_.1} parent=0 // pred_fallthru
    _
  // Predicated region
  $region10: #{_lambda_.1} parent=0 // pred_check
    _
  $region11: #{_lambda_.1} parent=0 // pred_check_branch
    %15 = sbr.rel (0) target = $region13
  $region12: #{_lambda_.1} parent=0 // pred_region
    _
  $region13: #{_lambda_.1} parent=0 // pred_fallthru
    _
  // Predicated region
  $region14: #{_lambda_.1} parent=0 // pred_check
    _
  $region15: #{_lambda_.1} parent=0 // pred_check_branch
    %17 = sbr.rel (0) target = $region17
  $region16: #{_lambda_.1} parent=0 // pred_region
    _
  $region17: #{_lambda_.1} parent=0 // pred_fallthru
    _
  // Predicated region
  $region18: #{_lambda_.1} parent=0 // pred_check
    _
  $region19: #{_lambda_.1} parent=0 // pred_check_branch
    %19 = sbr.rel (0) target = $region21
  $region20: #{_lambda_.1} parent=0 // pred_region
    _
  $region21: #{_lambda_.1} parent=0 // pred_fallthru
    _
  %v20 = vld [vmem:[%s0] sm:$0xff]
  %v21 = vld [vmem:[%s1] sm:$0xff]
  %v22 = vld [vmem:[%s1 + $0x8] sm:$0xff]
  %v23 = vld [vmem:[%s1 + $0x10] sm:$0xff]
  %v24 = vld [vmem:[%s1 + $0x18] sm:$0xff]
  %v25 = vld [vmem:[%s1 + $0x20] sm:$0xff]
  %v26 = vld [vmem:[%s1 + $0x28] sm:$0xff]
  %v27 = vld [vmem:[%s1 + $0x30] sm:$0xff]
  %v28 = vld [vmem:[%s1 + $0x38] sm:$0xff]
  %v29 = vld [vmem:[%s1 + $0x40] sm:$0xff]
  %v30 = vld [vmem:[%s1 + $0x48] sm:$0xff]
  %v31 = vld [vmem:[%s1 + $0x50] sm:$0xff]
  %v32 = vld [vmem:[%s1 + $0x58] sm:$0xff]
  %v33 = vld [vmem:[%s1 + $0x60] sm:$0xff]
  %v34 = vld [vmem:[%s1 + $0x68] sm:$0xff]
  %v35 = vld [vmem:[%s1 + $0x70] sm:$0xff]
  %v36 = vld [vmem:[%s1 + $0x78] sm:$0xff]
  %v37 = vld [vmem:[%s1 + $0x80] sm:$0xff]
  %v38 = vld [vmem:[%s1 + $0x88] sm:$0xff]
  %v39 = vld [vmem:[%s1 + $0x90] sm:$0xff]
  %v40 = vld [vmem:[%s1 + $0x98] sm:$0xff]
  %v41 = vld [vmem:[%s1 + $0xa0] sm:$0xff]
  %v42 = vld [vmem:[%s1 + $0xa8] sm:$0xff]
  %v43 = vld [vmem:[%s1 + $0xb0] sm:$0xff]
  %v44 = vld [vmem:[%s1 + $0xb8] sm:$0xff]
  %v45 = vld [vmem:[%s1 + $0xc0] sm:$0xff]
  %v46 = vld [vmem:[%s1 + $0xc8] sm:$0xff]
  %v47 = vld [vmem:[%s1 + $0xd0] sm:$0xff]
  %v48 = vld [vmem:[%s1 + $0xd8] sm:$0xff]
  %v49 = vld [vmem:[%s1 + $0xe0] sm:$0xff]
  %v50 = vld [vmem:[%s1 + $0xe8] sm:$0xff]
  %v51 = vld [vmem:[%s1 + $0xf0] sm:$0xff]
  %v52 = vld [vmem:[%s1 + $0xf8] sm:$0xff]
  %v53 = vld [vmem:[%s2] sm:$0x3]
  %v55 = vlaneseq
  %v56 = vshrl.u32 %v55, 7
  %v57 = vsub.s32 0, %v56
  %v58 = vrot.slane %v53, %v57
  %v59 = vlaneseq
  %v60 = vshrl.u32 %v59, 7
  %v61 = vsub.s32 1, %v60
  %v62 = vrot.slane %v53, %v61
  %v66 = vunpack.c.l.b16 %v20
  %v67 = vunpack.c.h.b16 %v20
  %v68 = vpack.c.b16 %v66, %v66
  %v69 = vpack.c.b16 %v67, %v67
  %v104 = vunpack.c.l.b16 %v21
  %v105 = vunpack.c.h.b16 %v21
  %v106 = vunpack.c.l.b16 %v22
  %v107 = vunpack.c.h.b16 %v22
  %v108 = vunpack.c.l.b16 %v23
  %v109 = vunpack.c.h.b16 %v23
  %v110 = vunpack.c.l.b16 %v24
  %v111 = vunpack.c.h.b16 %v24
  %v112 = vunpack.c.l.b16 %v25
  %v113 = vunpack.c.h.b16 %v25
  %v114 = vunpack.c.l.b16 %v26
  %v115 = vunpack.c.h.b16 %v26
  %v116 = vunpack.c.l.b16 %v27
  %v117 = vunpack.c.h.b16 %v27
  %v118 = vunpack.c.l.b16 %v28
  %v119 = vunpack.c.h.b16 %v28
  %v120 = vunpack.c.l.b16 %v29
  %v121 = vunpack.c.h.b16 %v29
  %v122 = vunpack.c.l.b16 %v30
  %v123 = vunpack.c.h.b16 %v30
  %v124 = vunpack.c.l.b16 %v31
  %v125 = vunpack.c.h.b16 %v31
  %v126 = vunpack.c.l.b16 %v32
  %v127 = vunpack.c.h.b16 %v32
  %v128 = vunpack.c.l.b16 %v33
  %v129 = vunpack.c.h.b16 %v33
  %v130 = vunpack.c.l.b16 %v34
  %v131 = vunpack.c.h.b16 %v34
  %v132 = vunpack.c.l.b16 %v35
  %v133 = vunpack.c.h.b16 %v35
  %v134 = vunpack.c.l.b16 %v36
  %v135 = vunpack.c.h.b16 %v36
  %v136 = vunpack.c.l.b16 %v37
  %v137 = vunpack.c.h.b16 %v37
  %v138 = vunpack.c.l.b16 %v38
  %v139 = vunpack.c.h.b16 %v38
  %v140 = vunpack.c.l.b16 %v39
  %v141 = vunpack.c.h.b16 %v39
  %v142 = vunpack.c.l.b16 %v40
  %v143 = vunpack.c.h.b16 %v40
  %v144 = vunpack.c.l.b16 %v41
  %v145 = vunpack.c.h.b16 %v41
  %v146 = vunpack.c.l.b16 %v42
  %v147 = vunpack.c.h.b16 %v42
  %v148 = vunpack.c.l.b16 %v43
  %v149 = vunpack.c.h.b16 %v43
  %v150 = vunpack.c.l.b16 %v44
  %v151 = vunpack.c.h.b16 %v44
  %v152 = vunpack.c.l.b16 %v45
  %v153 = vunpack.c.h.b16 %v45
  %v154 = vunpack.c.l.b16 %v46
  %v155 = vunpack.c.h.b16 %v46
  %v156 = vunpack.c.l.b16 %v47
  %v157 = vunpack.c.h.b16 %v47
  %v158 = vunpack.c.l.b16 %v48
  %v159 = vunpack.c.h.b16 %v48
  %v160 = vunpack.c.l.b16 %v49
  %v161 = vunpack.c.h.b16 %v49
  %v162 = vunpack.c.l.b16 %v50
  %v163 = vunpack.c.h.b16 %v50
  %v164 = vunpack.c.l.b16 %v51
  %v165 = vunpack.c.h.b16 %v51
  %v166 = vunpack.c.l.b16 %v52
  %v167 = vunpack.c.h.b16 %v52
  %v168 = vpack.c.b16 %v106, %v104
  %v169 = vpack.c.b16 %v107, %v105
  %v170 = vpack.c.b16 %v110, %v108
  %v171 = vpack.c.b16 %v111, %v109
  %v172 = vpack.c.b16 %v114, %v112
  %v173 = vpack.c.b16 %v115, %v113
  %v174 = vpack.c.b16 %v118, %v116
  %v175 = vpack.c.b16 %v119, %v117
  %v176 = vpack.c.b16 %v122, %v120
  %v177 = vpack.c.b16 %v123, %v121
  %v178 = vpack.c.b16 %v126, %v124
  %v179 = vpack.c.b16 %v127, %v125
  %v180 = vpack.c.b16 %v130, %v128
  %v181 = vpack.c.b16 %v131, %v129
  %v182 = vpack.c.b16 %v134, %v132
  %v183 = vpack.c.b16 %v135, %v133
  %v184 = vpack.c.b16 %v138, %v136
  %v185 = vpack.c.b16 %v139, %v137
  %v186 = vpack.c.b16 %v142, %v140
  %v187 = vpack.c.b16 %v143, %v141
  %v188 = vpack.c.b16 %v146, %v144
  %v189 = vpack.c.b16 %v147, %v145
  %v190 = vpack.c.b16 %v150, %v148
  %v191 = vpack.c.b16 %v151, %v149
  %v192 = vpack.c.b16 %v154, %v152
  %v193 = vpack.c.b16 %v155, %v153
  %v194 = vpack.c.b16 %v158, %v156
  %v195 = vpack.c.b16 %v159, %v157
  %v196 = vpack.c.b16 %v162, %v160
  %v197 = vpack.c.b16 %v163, %v161
  %v198 = vpack.c.b16 %v166, %v164
  %v199 = vpack.c.b16 %v167, %v165
  %232 = vmatprep.subr.bf16.mxu0 %v183
  %233 = vmatpush1.bf16.msra.mxu0 %v182
  %234 = vmatprep.subr.bf16.mxu0 %v181
  %235 = vmatpush1.bf16.msra.mxu0 %v180
  %236 = vmatprep.subr.bf16.mxu0 %v179
  %237 = vmatpush1.bf16.msra.mxu0 %v178
  %238 = vmatprep.subr.bf16.mxu0 %v177
  %239 = vmatpush1.bf16.msra.mxu0 %v176
  %240 = vmatprep.subr.bf16.mxu0 %v175
  %241 = vmatpush1.bf16.msra.mxu0 %v174
  %242 = vmatprep.subr.bf16.mxu0 %v173
  %243 = vmatpush1.bf16.msra.mxu0 %v172
  %244 = vmatprep.subr.bf16.mxu0 %v171
  %245 = vmatpush1.bf16.msra.mxu0 %v170
  %246 = vmatprep.subr.bf16.mxu0 %v169
  %247 = vmatpush1.bf16.msra.mxu0 %v168
  %248 = vmatprep.subr.bf16.mxu0 %v199
  %249 = vmatpush2.bf16.msra.mxu0 %v198
  %250 = vmatprep.subr.bf16.mxu0 %v197
  %251 = vmatpush2.bf16.msra.mxu0 %v196
  %252 = vmatprep.subr.bf16.mxu0 %v195
  %253 = vmatpush2.bf16.msra.mxu0 %v194
  %254 = vmatprep.subr.bf16.mxu0 %v193
  %255 = vmatpush2.bf16.msra.mxu0 %v192
  %256 = vmatprep.subr.bf16.mxu0 %v191
  %257 = vmatpush2.bf16.msra.mxu0 %v190
  %258 = vmatprep.subr.bf16.mxu0 %v189
  %259 = vmatpush2.bf16.msra.mxu0 %v188
  %260 = vmatprep.subr.bf16.mxu0 %v187
  %261 = vmatpush2.bf16.msra.mxu0 %v186
  %262 = vmatprep.subr.bf16.mxu0 %v185
  %263 = vmatpush2.bf16.msra.mxu0 %v184
  %264 = vmatprep.mubr.bf16.mxu0 %v69
  %265 = vmatmul.mubr.bf16.gmra.mxu0 %v68
  %v266 = vpop.f32.mrf.mxu0
  %v267 = vadd.f32 %v58, %v266
  %v268 = vpop.f32.mrf.mxu0
  %v269 = vadd.f32 %v62, %v268
  %v270 = vpop.f32.mrf.mxu0
  %v271 = vpop.f32.mrf.mxu0
  %272 = vdwg.mxu0
  %v273 = vpack.c.bf16 %v267, %v267
  %v274 = vpack.c.bf16 %v269, %v269
  %v275 = vld [vmem:[%s3] sm:$0xff]
  %v276 = vld [vmem:[%s3 + $0x8] sm:$0xff]
  %v277 = vld [vmem:[%s3 + $0x10] sm:$0xff]
  %v278 = vld [vmem:[%s3 + $0x18] sm:$0xff]
  %v279 = vld [vmem:[%s3 + $0x20] sm:$0xff]
  %v280 = vld [vmem:[%s3 + $0x28] sm:$0xff]
  %v281 = vld [vmem:[%s3 + $0x30] sm:$0xff]
  %v282 = vld [vmem:[%s3 + $0x38] sm:$0xff]
  %v283 = vld [vmem:[%s3 + $0x40] sm:$0xff]
  %v284 = vld [vmem:[%s3 + $0x48] sm:$0xff]
  %v285 = vld [vmem:[%s3 + $0x50] sm:$0xff]
  %v286 = vld [vmem:[%s3 + $0x58] sm:$0xff]
  %v287 = vld [vmem:[%s3 + $0x60] sm:$0xff]
  %v288 = vld [vmem:[%s3 + $0x68] sm:$0xff]
  %v289 = vld [vmem:[%s3 + $0x70] sm:$0xff]
  %v290 = vld [vmem:[%s3 + $0x78] sm:$0xff]
  %v291 = vld [vmem:[%s3 + $0x80] sm:$0xff]
  %v292 = vld [vmem:[%s3 + $0x88] sm:$0xff]
  %v293 = vld [vmem:[%s3 + $0x90] sm:$0xff]
  %v294 = vld [vmem:[%s3 + $0x98] sm:$0xff]
  %v295 = vld [vmem:[%s3 + $0xa0] sm:$0xff]
  %v296 = vld [vmem:[%s3 + $0xa8] sm:$0xff]
  %v297 = vld [vmem:[%s3 + $0xb0] sm:$0xff]
  %v298 = vld [vmem:[%s3 + $0xb8] sm:$0xff]
  %v299 = vld [vmem:[%s3 + $0xc0] sm:$0xff]
  %v300 = vld [vmem:[%s3 + $0xc8] sm:$0xff]
  %v301 = vld [vmem:[%s3 + $0xd0] sm:$0xff]
  %v302 = vld [vmem:[%s3 + $0xd8] sm:$0xff]
  %v303 = vld [vmem:[%s3 + $0xe0] sm:$0xff]
  %v304 = vld [vmem:[%s3 + $0xe8] sm:$0xff]
  %v305 = vld [vmem:[%s3 + $0xf0] sm:$0xff]
  %v306 = vld [vmem:[%s3 + $0xf8] sm:$0xff]
  %v307 = vld [vmem:[%s4] sm:$0x3]
  %v309 = vlaneseq
  %v310 = vshrl.u32 %v309, 7
  %v311 = vsub.s32 0, %v310
  %v312 = vrot.slane %v307, %v311
  %v313 = vlaneseq
  %v314 = vshrl.u32 %v313, 7
  %v315 = vsub.s32 1, %v314
  %v316 = vrot.slane %v307, %v315
  %v351 = vunpack.c.l.b16 %v275
  %v352 = vunpack.c.h.b16 %v275
  %v353 = vunpack.c.l.b16 %v276
  %v354 = vunpack.c.h.b16 %v276
  %v355 = vunpack.c.l.b16 %v277
  %v356 = vunpack.c.h.b16 %v277
  %v357 = vunpack.c.l.b16 %v278
  %v358 = vunpack.c.h.b16 %v278
  %v359 = vunpack.c.l.b16 %v279
  %v360 = vunpack.c.h.b16 %v279
  %v361 = vunpack.c.l.b16 %v280
  %v362 = vunpack.c.h.b16 %v280
  %v363 = vunpack.c.l.b16 %v281
  %v364 = vunpack.c.h.b16 %v281
  %v365 = vunpack.c.l.b16 %v282
  %v366 = vunpack.c.h.b16 %v282
  %v367 = vunpack.c.l.b16 %v283
  %v368 = vunpack.c.h.b16 %v283
  %v369 = vunpack.c.l.b16 %v284
  %v370 = vunpack.c.h.b16 %v284
  %v371 = vunpack.c.l.b16 %v285
  %v372 = vunpack.c.h.b16 %v285
  %v373 = vunpack.c.l.b16 %v286
  %v374 = vunpack.c.h.b16 %v286
  %v375 = vunpack.c.l.b16 %v287
  %v376 = vunpack.c.h.b16 %v287
  %v377 = vunpack.c.l.b16 %v288
  %v378 = vunpack.c.h.b16 %v288
  %v379 = vunpack.c.l.b16 %v289
  %v380 = vunpack.c.h.b16 %v289
  %v381 = vunpack.c.l.b16 %v290
  %v382 = vunpack.c.h.b16 %v290
  %v383 = vunpack.c.l.b16 %v291
  %v384 = vunpack.c.h.b16 %v291
  %v385 = vunpack.c.l.b16 %v292
  %v386 = vunpack.c.h.b16 %v292
  %v387 = vunpack.c.l.b16 %v293
  %v388 = vunpack.c.h.b16 %v293
  %v389 = vunpack.c.l.b16 %v294
  %v390 = vunpack.c.h.b16 %v294
  %v391 = vunpack.c.l.b16 %v295
  %v392 = vunpack.c.h.b16 %v295
  %v393 = vunpack.c.l.b16 %v296
  %v394 = vunpack.c.h.b16 %v296
  %v395 = vunpack.c.l.b16 %v297
  %v396 = vunpack.c.h.b16 %v297
  %v397 = vunpack.c.l.b16 %v298
  %v398 = vunpack.c.h.b16 %v298
  %v399 = vunpack.c.l.b16 %v299
  %v400 = vunpack.c.h.b16 %v299
  %v401 = vunpack.c.l.b16 %v300
  %v402 = vunpack.c.h.b16 %v300
  %v403 = vunpack.c.l.b16 %v301
  %v404 = vunpack.c.h.b16 %v301
  %v405 = vunpack.c.l.b16 %v302
  %v406 = vunpack.c.h.b16 %v302
  %v407 = vunpack.c.l.b16 %v303
  %v408 = vunpack.c.h.b16 %v303
  %v409 = vunpack.c.l.b16 %v304
  %v410 = vunpack.c.h.b16 %v304
  %v411 = vunpack.c.l.b16 %v305
  %v412 = vunpack.c.h.b16 %v305
  %v413 = vunpack.c.l.b16 %v306
  %v414 = vunpack.c.h.b16 %v306
  %v415 = vpack.c.b16 %v353, %v351
  %v416 = vpack.c.b16 %v354, %v352
  %v417 = vpack.c.b16 %v357, %v355
  %v418 = vpack.c.b16 %v358, %v356
  %v419 = vpack.c.b16 %v361, %v359
  %v420 = vpack.c.b16 %v362, %v360
  %v421 = vpack.c.b16 %v365, %v363
  %v422 = vpack.c.b16 %v366, %v364
  %v423 = vpack.c.b16 %v369, %v367
  %v424 = vpack.c.b16 %v370, %v368
  %v425 = vpack.c.b16 %v373, %v371
  %v426 = vpack.c.b16 %v374, %v372
  %v427 = vpack.c.b16 %v377, %v375
  %v428 = vpack.c.b16 %v378, %v376
  %v429 = vpack.c.b16 %v381, %v379
  %v430 = vpack.c.b16 %v382, %v380
  %v431 = vpack.c.b16 %v385, %v383
  %v432 = vpack.c.b16 %v386, %v384
  %v433 = vpack.c.b16 %v389, %v387
  %v434 = vpack.c.b16 %v390, %v388
  %v435 = vpack.c.b16 %v393, %v391
  %v436 = vpack.c.b16 %v394, %v392
  %v437 = vpack.c.b16 %v397, %v395
  %v438 = vpack.c.b16 %v398, %v396
  %v439 = vpack.c.b16 %v401, %v399
  %v440 = vpack.c.b16 %v402, %v400
  %v441 = vpack.c.b16 %v405, %v403
  %v442 = vpack.c.b16 %v406, %v404
  %v443 = vpack.c.b16 %v409, %v407
  %v444 = vpack.c.b16 %v410, %v408
  %v445 = vpack.c.b16 %v413, %v411
  %v446 = vpack.c.b16 %v414, %v412
  %479 = vmatprep.subr.bf16.mxu0 %v430
  %480 = vmatpush1.bf16.msra.mxu0 %v429
  %481 = vmatprep.subr.bf16.mxu0 %v428
  %482 = vmatpush1.bf16.msra.mxu0 %v427
  %483 = vmatprep.subr.bf16.mxu0 %v426
  %484 = vmatpush1.bf16.msra.mxu0 %v425
  %485 = vmatprep.subr.bf16.mxu0 %v424
  %486 = vmatpush1.bf16.msra.mxu0 %v423
  %487 = vmatprep.subr.bf16.mxu0 %v422
  %488 = vmatpush1.bf16.msra.mxu0 %v421
  %489 = vmatprep.subr.bf16.mxu0 %v420
  %490 = vmatpush1.bf16.msra.mxu0 %v419
  %491 = vmatprep.subr.bf16.mxu0 %v418
  %492 = vmatpush1.bf16.msra.mxu0 %v417
  %493 = vmatprep.subr.bf16.mxu0 %v416
  %494 = vmatpush1.bf16.msra.mxu0 %v415
  %495 = vmatprep.subr.bf16.mxu0 %v446
  %496 = vmatpush2.bf16.msra.mxu0 %v445
  %497 = vmatprep.subr.bf16.mxu0 %v444
  %498 = vmatpush2.bf16.msra.mxu0 %v443
  %499 = vmatprep.subr.bf16.mxu0 %v442
  %500 = vmatpush2.bf16.msra.mxu0 %v441
  %501 = vmatprep.subr.bf16.mxu0 %v440
  %502 = vmatpush2.bf16.msra.mxu0 %v439
  %503 = vmatprep.subr.bf16.mxu0 %v438
  %504 = vmatpush2.bf16.msra.mxu0 %v437
  %505 = vmatprep.subr.bf16.mxu0 %v436
  %506 = vmatpush2.bf16.msra.mxu0 %v435
  %507 = vmatprep.subr.bf16.mxu0 %v434
  %508 = vmatpush2.bf16.msra.mxu0 %v433
  %509 = vmatprep.subr.bf16.mxu0 %v432
  %510 = vmatpush2.bf16.msra.mxu0 %v431
  %511 = vmatprep.mubr.bf16.mxu0 %v274
  %512 = vmatmul.mubr.bf16.gmra.mxu0 %v273
  %v513 = vpop.f32.mrf.mxu0
  %v514 = vadd.f32 %v312, %v513
  %v515 = vpop.f32.mrf.mxu0
  %v516 = vadd.f32 %v316, %v515
  %v517 = vpop.f32.mrf.mxu0
  %v518 = vpop.f32.mrf.mxu0
  %519 = vdwg.mxu0
  %v520 = vand.u32 2147483647, %v514
  %v521 = vand.u32 2147483647, %v516
  %v522 = vsub.f32 %v520, 0.01
  %v523 = vsub.f32 %v521, 0.01
  %v524 = vmax.f32 %v522, 0.0
  %v525 = vmax.f32 %v523, 0.0
  %vm526 = vcmp.ge.f32.partialorder %v514, 0.0
  %vm527 = vcmp.ge.f32.partialorder %v516, 0.0
  %v528 = vsub.f32 0.0, %v524
  %v529 = vsub.f32 0.0, %v525
  %v530 = vsel %vm526, %v524, %v528
  %v531 = vsel %vm527, %v525, %v529
  %532 = vst [vmem:[%s5] sm:$0xff] %v530
  %533 = vst [vmem:[%s5 + $0x8] sm:$0xff] %v531
  // Predicated region
  $region22: #{_lambda_.1} parent=0 // pred_check
    _
  $region23: #{_lambda_.1} parent=0 // pred_check_branch
    %535 = sbr.rel (0) target = $region25
  $region24: #{_lambda_.1} parent=0 // pred_region
    _
  $region25: #{_lambda_.1} parent=0 // pred_fallthru
    _
  // Predicated region
  $region26: #{_lambda_.1} parent=0 // pred_check
    _
  $region27: #{_lambda_.1} parent=0 // pred_check_branch
    %537 = sbr.rel (0) target = $region29
  $region28: #{_lambda_.1} parent=0 // pred_region
    _
  $region29: #{_lambda_.1} parent=0 // pred_fallthru
    _

// kernel: reverse.1
$region0: #{reverse.1}
  #allocation0 [shape = 's32[1]{0}', space=sflag, size = 0x4, scoped, tag = 'scoped memory for reverse.1']
  %s0 = inlined_call_operand.vmem [shape: f32[2,32,16,7], index: 0, kind: input, shape index: {}]
  %s1 = inlined_call_operand.vmem [shape: f32[2,32,16,7], index: 1, kind: output, shape index: {}]
  %s2 = scalar_lea.vmem %s0, 96
  %v3 = vld [vmem:[%s2] sm:$0xff]
  %4 = vst [vmem:[%s1] sm:$0xff] %v3
  %s5 = scalar_lea.vmem %s0, 208
  %v6 = vld [vmem:[%s5] sm:$0xff]
  %s7 = scalar_lea.vmem %s1, 112
  %8 = vst [vmem:[%s7] sm:$0xff] %v6
  %s9 = scalar_lea.vmem %s0, 80
  %v10 = vld [vmem:[%s9] sm:$0xff]
  %s11 = scalar_lea.vmem %s1, 16
  %12 = vst [vmem:[%s11] sm:$0xff] %v10
  %s13 = scalar_lea.vmem %s0, 192
  %v14 = vld [vmem:[%s13] sm:$0xff]
  %s15 = scalar_lea.vmem %s1, 128
  %16 = vst [vmem:[%s15] sm:$0xff] %v14
  %s17 = scalar_lea.vmem %s0, 64
  %v18 = vld [vmem:[%s17] sm:$0xff]
  %s19 = scalar_lea.vmem %s1, 32
  %20 = vst [vmem:[%s19] sm:$0xff] %v18
  %s21 = scalar_lea.vmem %s0, 176
  %v22 = vld [vmem:[%s21] sm:$0xff]
  %s23 = scalar_lea.vmem %s1, 144
  %24 = vst [vmem:[%s23] sm:$0xff] %v22
  %s25 = scalar_lea.vmem %s0, 48
  %v26 = vld [vmem:[%s25] sm:$0xff]
  %s27 = scalar_lea.vmem %s1, 48
  %28 = vst [vmem:[%s27] sm:$0xff] %v26
  %s29 = scalar_lea.vmem %s0, 160
  %v30 = vld [vmem:[%s29] sm:$0xff]
  %s31 = scalar_lea.vmem %s1, 160
  %32 = vst [vmem:[%s31] sm:$0xff] %v30
  %s33 = scalar_lea.vmem %s0, 32
  %v34 = vld [vmem:[%s33] sm:$0xff]
  %s35 = scalar_lea.vmem %s1, 64
  %36 = vst [vmem:[%s35] sm:$0xff] %v34
  %s37 = scalar_lea.vmem %s0, 144
  %v38 = vld [vmem:[%s37] sm:$0xff]
  %s39 = scalar_lea.vmem %s1, 176
  %40 = vst [vmem:[%s39] sm:$0xff] %v38
  %s41 = scalar_lea.vmem %s0, 16
  %v42 = vld [vmem:[%s41] sm:$0xff]
  %s43 = scalar_lea.vmem %s1, 80
  %44 = vst [vmem:[%s43] sm:$0xff] %v42
  %s45 = scalar_lea.vmem %s0, 128
  %v46 = vld [vmem:[%s45] sm:$0xff]
  %s47 = scalar_lea.vmem %s1, 192
  %48 = vst [vmem:[%s47] sm:$0xff] %v46
  %v49 = vld [vmem:[%s0] sm:$0xff]
  %s50 = scalar_lea.vmem %s1, 96
  %51 = vst [vmem:[%s50] sm:$0xff] %v49
  %s52 = scalar_lea.vmem %s0, 112
  %v53 = vld [vmem:[%s52] sm:$0xff]
  %s54 = scalar_lea.vmem %s1, 208
  %55 = vst [vmem:[%s54] sm:$0xff] %v53
  %s56 = scalar_lea.vmem %s0, 104
  %v57 = vld [vmem:[%s56] sm:$0xff]
  %s58 = scalar_lea.vmem %s1, 8
  %59 = vst [vmem:[%s58] sm:$0xff] %v57
  %s60 = scalar_lea.vmem %s0, 216
  %v61 = vld [vmem:[%s60] sm:$0xff]
  %s62 = scalar_lea.vmem %s1, 120
  %63 = vst [vmem:[%s62] sm:$0xff] %v61
  %s64 = scalar_lea.vmem %s0, 88
  %v65 = vld [vmem:[%s64] sm:$0xff]
  %s66 = scalar_lea.vmem %s1, 24
  %67 = vst [vmem:[%s66] sm:$0xff] %v65
  %s68 = scalar_lea.vmem %s0, 200
  %v69 = vld [vmem:[%s68] sm:$0xff]
  %s70 = scalar_lea.vmem %s1, 136
  %71 = vst [vmem:[%s70] sm:$0xff] %v69
  %s72 = scalar_lea.vmem %s0, 72
  %v73 = vld [vmem:[%s72] sm:$0xff]
  %s74 = scalar_lea.vmem %s1, 40
  %75 = vst [vmem:[%s74] sm:$0xff] %v73
  %s76 = scalar_lea.vmem %s0, 184
  %v77 = vld [vmem:[%s76] sm:$0xff]
  %s78 = scalar_lea.vmem %s1, 152
  %79 = vst [vmem:[%s78] sm:$0xff] %v77
  %s80 = scalar_lea.vmem %s0, 56
  %v81 = vld [vmem:[%s80] sm:$0xff]
  %s82 = scalar_lea.vmem %s1, 56
  %83 = vst [vmem:[%s82] sm:$0xff] %v81
  %s84 = scalar_lea.vmem %s0, 168
  %v85 = vld [vmem:[%s84] sm:$0xff]
  %s86 = scalar_lea.vmem %s1, 168
  %87 = vst [vmem:[%s86] sm:$0xff] %v85
  %s88 = scalar_lea.vmem %s0, 40
  %v89 = vld [vmem:[%s88] sm:$0xff]
  %s90 = scalar_lea.vmem %s1, 72
  %91 = vst [vmem:[%s90] sm:$0xff] %v89
  %s92 = scalar_lea.vmem %s0, 152
  %v93 = vld [vmem:[%s92] sm:$0xff]
  %s94 = scalar_lea.vmem %s1, 184
  %95 = vst [vmem:[%s94] sm:$0xff] %v93
  %s96 = scalar_lea.vmem %s0, 24
  %v97 = vld [vmem:[%s96] sm:$0xff]
  %s98 = scalar_lea.vmem %s1, 88
  %99 = vst [vmem:[%s98] sm:$0xff] %v97
  %s100 = scalar_lea.vmem %s0, 136
  %v101 = vld [vmem:[%s100] sm:$0xff]
  %s102 = scalar_lea.vmem %s1, 200
  %103 = vst [vmem:[%s102] sm:$0xff] %v101
  %s104 = scalar_lea.vmem %s0, 8
  %v105 = vld [vmem:[%s104] sm:$0xff]
  %s106 = scalar_lea.vmem %s1, 104
  %107 = vst [vmem:[%s106] sm:$0xff] %v105
  %s108 = scalar_lea.vmem %s0, 120
  %v109 = vld [vmem:[%s108] sm:$0xff]
  %s110 = scalar_lea.vmem %s1, 216
  %111 = vst [vmem:[%s110] sm:$0xff] %v109

</llo_original>
